<compile_context>
chip_gen: v7x
topology: tpu7x:2x2x1
jax: 0.10.0
libtpu: 0.0.40
codegen_flags: <defaults>
</compile_context>

<pallas_src>
from functools import partial

import jax
import jax.numpy as jnp
from jax import lax
from jax.experimental import pallas as pl
from jax.experimental.pallas import tpu as pltpu

EPS = 1e-5


def _layernorm_kernel(x_ref, wb_ref, o_ref, *, eps):
    # x_ref: (TR, D) in the input dtype; upcast once in-register.
    x = x_ref[...].astype(jnp.float32)
    w = wb_ref[0:1, :]                            # (1, D) f32
    b = wb_ref[1:2, :]                            # (1, D) f32

    mean = jnp.mean(x, axis=-1, keepdims=True)
    xc = x - mean
    var = jnp.mean(xc * xc, axis=-1, keepdims=True)   # stable two-pass form
    inv_std = lax.rsqrt(var + eps)                     # EUP slot (frees VALU)
    o_ref[...] = (xc * inv_std * w + b).astype(o_ref.dtype)


def _round_up(x, m):
    return ((x + m - 1) // m) * m


def triton_layernorm(x, w, b, eps=EPS):
    """LayerNorm over the last dim of x (any leading shape) as a Pallas TPU kernel."""
    orig_shape = x.shape
    d = int(orig_shape[-1])
    rows = 1
    for s in orig_shape[:-1]:
        rows *= int(s)

    x2 = x.reshape(rows, d)                     # free metadata reshape
    itemsize = int(x2.dtype.itemsize)

    # Sublane alignment: 8 for 32-bit, 16 for 16-bit, 32 for 8-bit dtypes.
    align = {1: 32, 2: 16}.get(itemsize, 8)

    # Row tile from a VMEM byte budget (~3 MiB per pipelined buffer) so that
    # double-buffered in+out slabs stay well under default scoped VMEM on all
    # generations (16 MiB v5e, 32 MiB v6e/v7x, 64 MiB physical v7x).
    slab_budget = 3 * 1024 * 1024
    tr_budget = max(align, (slab_budget // max(1, d * itemsize)) // align * align)
    # Aim for >= 8 grid steps when rows allow, so the "parallel" row axis can
    # shard across both TensorCores on v7x instead of collapsing to grid=(1,).
    tr_mega = max(align, _round_up(pl.cdiv(rows, 8), align))
    tr = min(tr_budget, tr_mega)

    grid = (pl.cdiv(rows, tr),)                 # ragged last block handled by Pallas

    # Packed [w; b] as a single tiny f32 input -> one BlockSpec / DMA pipeline.
    wb = jnp.stack([jnp.asarray(w), jnp.asarray(b)], axis=0).astype(jnp.float32)

    slab_bytes = tr * d * itemsize
    vmem_need = 4 * slab_bytes + 4 * int(wb.size) * 4 + (2 << 20)   # bufs + headroom
    vmem_limit = int(min(64 << 20, max(vmem_need, 16 << 20)))

    cost = pl.CostEstimate(
        flops=7 * rows * d,
        transcendentals=rows,
        bytes_accessed=2 * rows * d * itemsize + int(wb.size) * 4,
    )

    out = pl.pallas_call(
        partial(_layernorm_kernel, eps=eps),
        out_shape=jax.ShapeDtypeStruct((rows, d), x2.dtype),
        grid=grid,
        in_specs=[
            pl.BlockSpec((tr, d), lambda i: (i, 0)),   # activation slab (native dtype)
            pl.BlockSpec((2, d), lambda i: (0, 0)),    # packed [w; b] (f32)
        ],
        out_specs=pl.BlockSpec((tr, d), lambda i: (i, 0)),
        compiler_params=pltpu.CompilerParams(
            dimension_semantics=("parallel",),
            vmem_limit_bytes=vmem_limit,
        ),
        cost_estimate=cost,
    )(x2, wb)

    return out.reshape(orig_shape)


def _reference(x, w, b, eps=EPS):
    xf = x.astype(jnp.float32)
    mean = xf.mean(-1, keepdims=True)
    xc = xf - mean
    var = (xc * xc).mean(-1, keepdims=True)
    return xc / jnp.sqrt(var + eps) * w.astype(jnp.float32) + b.astype(jnp.float32)


if __name__ == "__main__":
    key = jax.random.PRNGKey(0)
    keys = jax.random.split(key, 9)

    # config 1: x is [batch, seq, d_model], float32
    B, S, D = 2, 8, 32
    x = jax.random.normal(keys[0], (B, S, D), jnp.float32)
    w = 1.0 + 0.1 * jax.random.normal(keys[1], (D,), jnp.float32)
    b = 0.1 * jax.random.normal(keys[2], (D,), jnp.float32)
    out = jax.block_until_ready(triton_layernorm(x, w, b))
    ref = _reference(x, w, b)
    assert out.shape == x.shape and out.dtype == x.dtype
    assert jnp.allclose(out, ref, atol=1e-4, rtol=1e-4), float(jnp.max(jnp.abs(out - ref)))

    # config 2: row count not a multiple of the tile (ragged last block),
    #           d_model not a multiple of 128
    B2, S2, D2 = 3, 7, 48
    x2 = jax.random.normal(keys[3], (B2, S2, D2), jnp.float32)
    w2 = 1.0 + 0.1 * jax.random.normal(keys[4], (D2,), jnp.float32)
    b2 = 0.1 * jax.random.normal(keys[5], (D2,), jnp.float32)
    out2 = jax.block_until_ready(triton_layernorm(x2, w2, b2))
    ref2 = _reference(x2, w2, b2)
    assert jnp.allclose(out2, ref2, atol=1e-4, rtol=1e-4), float(jnp.max(jnp.abs(out2 - ref2)))

    # config 3: bf16 activations/params -> bf16 output, f32 compute in-register
    B3, S3, D3 = 2, 8, 128
    x3 = jax.random.normal(keys[6], (B3, S3, D3), jnp.float32).astype(jnp.bfloat16)
    w3 = (1.0 + 0.1 * jax.random.normal(keys[7], (D3,), jnp.float32)).astype(jnp.bfloat16)
    b3 = (0.1 * jax.random.normal(keys[8], (D3,), jnp.float32)).astype(jnp.bfloat16)
    out3 = jax.block_until_ready(triton_layernorm(x3, w3, b3))
    ref3 = _reference(x3, w3, b3)
    assert out3.dtype == jnp.bfloat16 and out3.shape == x3.shape
    assert jnp.allclose(out3.astype(jnp.float32), ref3, atol=3e-2, rtol=3e-2)

    print("KERNEL_OK")
</pallas_src>

<mosaic_0001>
module attributes {stable_mosaic.version = 11 : i64} {
  func.func @_layernorm_kernel(%arg0: i32, %arg1: memref<8x32xf32, #tpu.memory_space<vmem>>, %arg2: memref<2x32xf32, #tpu.memory_space<vmem>>, %arg3: memref<8x32xf32, #tpu.memory_space<vmem>>) attributes {dimension_semantics = [#tpu.dimension_semantics<parallel>], iteration_bounds = array<i64: 2>, scalar_prefetch = 0 : i64, scratch_operands = 0 : i64, tpu.core_type = #tpu.core_type<tc>, window_params = [{transform_indices = @transform_0, window_bounds = array<i64: 8, 32>}, {pipeline_mode = #tpu.pipeline_mode<synchronous>, transform_indices = @transform_1, window_bounds = array<i64: 2, 32>}, {transform_indices = @transform_2, window_bounds = array<i64: 8, 32>}]} {
    %c0 = arith.constant 0 : index
    %c0_0 = arith.constant 0 : index
    %0 = vector.load %arg1[%c0, %c0_0] : memref<8x32xf32, #tpu.memory_space<vmem>>, vector<8x32xf32>
    %c0_1 = arith.constant 0 : index
    %c0_2 = arith.constant 0 : index
    %1 = vector.load %arg2[%c0_1, %c0_2] : memref<2x32xf32, #tpu.memory_space<vmem>>, vector<1x32xf32>
    %c1 = arith.constant 1 : index
    %c0_3 = arith.constant 0 : index
    %2 = vector.load %arg2[%c1, %c0_3] : memref<2x32xf32, #tpu.memory_space<vmem>>, vector<1x32xf32>
    %cst = arith.constant dense<0.000000e+00> : vector<8xf32>
    %3 = vector.multi_reduction <add>, %0, %cst [1] : vector<8x32xf32> to vector<8xf32>
    %4 = vector.shape_cast %3 : vector<8xf32> to vector<8x1xf32>
    %cst_4 = arith.constant 3.200000e+01 : f32
    %5 = vector.broadcast %cst_4 : f32 to vector<8x1xf32>
    %6 = arith.divf %4, %5 : vector<8x1xf32>
    %7 = vector.broadcast %6 : vector<8x1xf32> to vector<8x32xf32>
    %8 = arith.subf %0, %7 : vector<8x32xf32>
    %9 = arith.mulf %8, %8 : vector<8x32xf32>
    %cst_5 = arith.constant dense<0.000000e+00> : vector<8xf32>
    %10 = vector.multi_reduction <add>, %9, %cst_5 [1] : vector<8x32xf32> to vector<8xf32>
    %11 = vector.shape_cast %10 : vector<8xf32> to vector<8x1xf32>
    %cst_6 = arith.constant 3.200000e+01 : f32
    %12 = vector.broadcast %cst_6 : f32 to vector<8x1xf32>
    %13 = arith.divf %11, %12 : vector<8x1xf32>
    %cst_7 = arith.constant 9.99999974E-6 : f32
    %14 = vector.broadcast %cst_7 : f32 to vector<8x1xf32>
    %15 = arith.addf %13, %14 : vector<8x1xf32>
    %16 = math.rsqrt %15 : vector<8x1xf32>
    %17 = vector.broadcast %16 : vector<8x1xf32> to vector<8x32xf32>
    %18 = arith.mulf %8, %17 : vector<8x32xf32>
    %19 = vector.broadcast %1 : vector<1x32xf32> to vector<8x32xf32>
    %20 = arith.mulf %18, %19 : vector<8x32xf32>
    %21 = vector.broadcast %2 : vector<1x32xf32> to vector<8x32xf32>
    %22 = arith.addf %20, %21 : vector<8x32xf32>
    %c0_8 = arith.constant 0 : index
    %c0_9 = arith.constant 0 : index
    %23 = vector.load %arg3[%c0_8, %c0_9] : memref<8x32xf32, #tpu.memory_space<vmem>>, vector<8x32xf32>
    tpu.vector_store %arg3[%c0_8, %c0_9], %22 {strides = array<i32>} : memref<8x32xf32, #tpu.memory_space<vmem>>, vector<8x32xf32>,
    return
  }
  func.func @transform_0(%arg0: i32) -> (i32, i32) {
    %c0_i32 = arith.constant 0 : i32
    %c0_i32_0 = arith.constant 0 : i32
    return %arg0, %c0_i32 : i32, i32
  }
  func.func @transform_1(%arg0: i32) -> (i32, i32) {
    %c0_i32 = arith.constant 0 : i32
    %c0_i32_0 = arith.constant 0 : i32
    %c0_i32_1 = arith.constant 0 : i32
    return %c0_i32, %c0_i32_0 : i32, i32
  }
  func.func @transform_2(%arg0: i32) -> (i32, i32) {
    %c0_i32 = arith.constant 0 : i32
    %c0_i32_0 = arith.constant 0 : i32
    return %arg0, %c0_i32 : i32, i32
  }
}

</mosaic_0001>

<llo_original>
// kernel: tpu_custom_call.1
$region0: #{tpu_custom_call.1}
  #allocation0 [shape = 'u32[]', space=smem, size = 0x4, offset = 0x4, fixed_abs, tag = 'smem constant byte address 0x4 - core index']
  #allocation1 [shape = 'u32[144,128]{1,0:T(1,128)}', space=vmem, size = 0x12000, scoped, tag = 'internal scratch']
  %s0 = inlined_call_operand.hbm [shape: f32[16,32], index: 0, kind: input, shape index: {}]
  %s1 = inlined_call_operand.vmem [shape: f32[2,32], index: 1, kind: input, shape index: {}]
  %s2 = inlined_call_operand.hbm [shape: f32[16,32], index: 2, kind: output, shape index: {}]
  %s3 = sld [smem:[#allocation0]]
  $region45: #{tpu_custom_call.1} parent=0
    _
  %s5 = ssub.s32 1, %s3
  %s6 = scalar_select 0, %s5, %s3
  $region1: #{tpu_custom_call.1} parent=0
    #allocation2 [shape = 'u8[8192]{0}', space=vmem, size = 0x2000, scoped, tag = 'input window, operand 0']
    #allocation3 [shape = 's32[2]{0}', space=sflag, size = 0x8, scoped, tag = 'scoped memory for tpu_custom_call.1']
    #allocation4 [shape = 's32[2]{0}', space=sflag, size = 0x8, scoped, tag = 'scoped memory for tpu_custom_call.1']
    #allocation5 [shape = 'u8[8192]{0}', space=vmem, size = 0x2000, scoped, tag = 'output window, operand 0']
    %7 = vsyncpa [#allocation3], 0
    %s8 = scalar_lea.sflag [#allocation3], 1
    %9 = vsyncpa %s8, 0
    %10 = vsyncpa [#allocation4], 0
    %s11 = scalar_lea.sflag [#allocation4], 1
    %12 = vsyncpa %s11, 0
    loop: start=0, step=1, limit=4
    $region2: #{tpu_custom_call.1} parent=1 // loop_pre_header
      _
    $region3: #{tpu_custom_call.1} parent=1 // loop_header
      %s14 = sphi 0, %s18
      %p15 = scmp.ge.s32.totalorder %s14, 4
      %s24 = sphi 0, %s26
      %s27 = sphi 0, %s24
      %s28 = sphi 0, %s27
      %s44 = sphi 0, %s28
      %s48 = sphi 0, %s48
      %s50 = sphi 0, %s48
      %s51 = sphi 0, %s50
      %s65 = sphi 0, %s51
      %s71 = sphi 0, %s73
      %s74 = sphi 0, %s71
      %s75 = sphi 0, %s74
      %s91 = sphi 0, %s75
    $region4: #{tpu_custom_call.1} parent=1 // loop_header_branch
      %17 = sbr.rel (%p15) target = $region8
    $region5: #{tpu_custom_call.1} parent=1 // loop_body
      %s19 = ssub.s32 %s14, 1
      %s20 = ssub.s32 %s14, 2
      %s21 = sadd.s32 %s14, 1
      %s22 = ssub.s32 %s14, %s21
      %p23 = scmp.eq.s32.totalorder %s22, 0
      %s25 = sadd.s32 %s24, 1
      %s26 = scalar_select %p23, %s24, %s25
      %p29 = pneg %p23
      %p30 = scmp.eq.s32.totalorder %s14, 1
      %p31 = por %p29, %p30
      %p32 = scmp.ne.s32.totalorder %s24, %s27
      %p33 = scmp.eq.s32.totalorder %s14, 0
      %p34 = por %p32, %p33
      %p35 = scmp.ne.s32.totalorder %s24, %s27
      %p36 = scmp.eq.s32.totalorder %s19, 1
      %p37 = por %p35, %p36
      %p38 = scmp.ne.s32.totalorder %s27, %s28
      %p39 = scmp.eq.s32.totalorder %s19, 0
      %p40 = por %p38, %p39
      %p41 = scmp.ne.s32.totalorder %s27, %s28
      %p42 = scmp.eq.s32.totalorder %s20, 1
      %p43 = por %p41, %p42
      %p45 = scmp.ne.s32.totalorder %s28, %s44
      %p46 = scmp.eq.s32.totalorder %s20, 0
      %p47 = por %p45, %p46
      %s49 = sadd.s32 %s48, 1
      %p52 = scmp.eq.s32.totalorder %s14, 1
      %p53 = scmp.ne.s32.totalorder %s48, %s50
      %p54 = scmp.eq.s32.totalorder %s14, 0
      %p55 = por %p53, %p54
      %p56 = scmp.ne.s32.totalorder %s48, %s50
      %p57 = scmp.eq.s32.totalorder %s19, 1
      %p58 = por %p56, %p57
      %p59 = scmp.ne.s32.totalorder %s50, %s51
      %p60 = scmp.eq.s32.totalorder %s19, 0
      %p61 = por %p59, %p60
      %p62 = scmp.ne.s32.totalorder %s50, %s51
      %p63 = scmp.eq.s32.totalorder %s20, 1
      %p64 = por %p62, %p63
      %p66 = scmp.ne.s32.totalorder %s51, %s65
      %p67 = scmp.eq.s32.totalorder %s20, 0
      %p68 = por %p66, %p67
      %s69 = ssub.s32 %s14, %s21
      %p70 = scmp.eq.s32.totalorder %s69, 0
      %s72 = sadd.s32 %s71, 1
      %s73 = scalar_select %p70, %s71, %s72
      %p76 = pneg %p70
      %p77 = scmp.eq.s32.totalorder %s14, 1
      %p78 = por %p76, %p77
      %p79 = scmp.ne.s32.totalorder %s71, %s74
      %p80 = scmp.eq.s32.totalorder %s14, 0
      %p81 = por %p79, %p80
      %p82 = scmp.ne.s32.totalorder %s71, %s74
      %p83 = scmp.eq.s32.totalorder %s19, 1
      %p84 = por %p82, %p83
      %p85 = scmp.ne.s32.totalorder %s74, %s75
      %p86 = scmp.eq.s32.totalorder %s19, 0
      %p87 = por %p85, %p86
      %p88 = scmp.ne.s32.totalorder %s74, %s75
      %p89 = scmp.eq.s32.totalorder %s20, 1
      %p90 = por %p88, %p89
      %p92 = scmp.ne.s32.totalorder %s75, %s91
      %p93 = scmp.eq.s32.totalorder %s20, 0
      %p94 = por %p92, %p93
      %p95 = scmp.le.s32.totalorder 1, %s14
      %p96 = scmp.lt.s32.totalorder %s14, 3
      %p97 = pnand %p95, %p96
      %p98 = pneg %p97
      // Predicated region
      $region9: #{tpu_custom_call.1} parent=5 // pred_check
        _
      $region10: #{tpu_custom_call.1} parent=5 // pred_check_branch
        %100 = sbr.rel (%p97) target = $region12
      $region11: #{tpu_custom_call.1} parent=5 // pred_region
        %s101 = ssub.s32 %s14, 1
        // Predicated region
        $region13: #{tpu_custom_call.1} parent=11 // pred_check
          %p102 = pneg %p61
        $region14: #{tpu_custom_call.1} parent=11 // pred_check_branch
          %104 = sbr.rel (%p102) target = $region16
        $region15: #{tpu_custom_call.1} parent=11 // pred_region
          _
        $region16: #{tpu_custom_call.1} parent=11 // pred_fallthru
          _
      $region12: #{tpu_custom_call.1} parent=5 // pred_fallthru
        _
      %p105 = scmp.lt.s32.totalorder %s14, 2
      // Predicated region
      $region17: #{tpu_custom_call.1} parent=5 // pred_check
        %p106 = pneg %p105
      $region18: #{tpu_custom_call.1} parent=5 // pred_check_branch
        %108 = sbr.rel (%p106) target = $region20
      $region19: #{tpu_custom_call.1} parent=5 // pred_region
        // Predicated region
        $region21: #{tpu_custom_call.1} parent=19 // pred_check
          %p109 = pneg %p34
        $region22: #{tpu_custom_call.1} parent=19 // pred_check_branch
          %111 = sbr.rel (%p109) target = $region24
        $region23: #{tpu_custom_call.1} parent=19 // pred_region
          %s112 = sand.u32 %s24, 1
          %s113 = scalar_lea.sflag [#allocation3], %s112
          %s114 = sand.u32 %s24, 1
          %s115 = smul.addr %s114, 8
          %s116 = scalar_lea.vmem [#allocation2], %s115
          %s118 = ssub.s32 128, 128
          %119 = vsyncadd %s113, %s118
          %s120 = smul.addr %s14, 128
          %s121 = scalar_lea.hbm %s0, %s120
          %s123 = sshll.u32 %s116, 4
          %s124 = int_to_ptr.vmem [resolvable:$true] %s123
          %126 = dma.hbm_to_vmem [thread:$0]  %s121, 128, %s124, %s113
        $region24: #{tpu_custom_call.1} parent=19 // pred_fallthru
          _
      $region20: #{tpu_custom_call.1} parent=5 // pred_fallthru
        _
      %p127 = scmp.le.s32.totalorder 1, %s14
      %p128 = scmp.lt.s32.totalorder %s14, 3
      %p129 = pnand %p127, %p128
      %p130 = pneg %p129
      // Predicated region
      $region25: #{tpu_custom_call.1} parent=5 // pred_check
        _
      $region26: #{tpu_custom_call.1} parent=5 // pred_check_branch
        %132 = sbr.rel (%p129) target = $region28
      $region27: #{tpu_custom_call.1} parent=5 // pred_region
        %s133 = ssub.s32 %s14, 1
        %s134 = sand.u32 %s27, 1
        %s135 = scalar_lea.sflag [#allocation3], %s134
        %s136 = sand.u32 %s27, 1
        %s137 = smul.addr %s136, 8
        %s138 = scalar_lea.vmem [#allocation2], %s137
        // Predicated region
        $region29: #{tpu_custom_call.1} parent=27 // pred_check
          %p139 = pneg %p40
        $region30: #{tpu_custom_call.1} parent=27 // pred_check_branch
          %141 = sbr.rel (%p139) target = $region32
        $region31: #{tpu_custom_call.1} parent=27 // pred_region
          %142 = dma.done %s135, 128
        $region32: #{tpu_custom_call.1} parent=27 // pred_fallthru
          _
        %s143 = sand.u32 %s27, 1
        %s144 = scalar_lea.sflag [#allocation3], %s143
        %s145 = sand.u32 %s27, 1
        %s146 = smul.addr %s145, 8
        %s147 = scalar_lea.vmem [#allocation2], %s146
        %p148 = pneg %p40
        %p149 = pneg %p37
        %p150 = pneg %p61
        %p151 = pneg %p58
        %p152 = pneg %p87
        %p153 = pneg %p84
        %s154 = sand.u32 %s74, 1
        %s155 = scalar_lea.sflag [#allocation4], %s154
        %s156 = sand.u32 %s74, 1
        %s157 = smul.addr %s156, 8
        %s158 = scalar_lea.vmem [#allocation5], %s157
        %v159 = vld [vmem:[%s138] sm:$0xff]
        %v160 = vld [vmem:[%s1] sm:$0x1]
        %v161 = vld [vmem:[%s1 + $0x1] sm:$0x1]
        %vm162 = vcmask 261120
        %v163 = vsel %vm162, %v159, 0.0
        %164 = vadd.xlane.f32.xlu0 %v163
        %v165 = vpop.xlane.xlu0 %164
        %v166 = vrcp.pop 32.0
        %v167 = vmul.f32 %v165, %v166
        %v168 = vsub.f32 %v159, %v167
        %v169 = vmul.f32 %v168, %v168
        %v170 = vsel %vm162, %v169, 0.0
        %171 = vadd.xlane.f32.xlu0 %v170
        %v172 = vpop.xlane.xlu0 %171
        %v173 = vmul.f32 %v172, %v166
        %v174 = vadd.f32 %v173, 1e-05
        %v175 = vrsqrt.pop %v174
        %v176 = vmul.f32 %v168, %v175
        %v177 = vlaneseq
        %v178 = vshrl.u32 %v177, 7
        %v179 = vsub.s32 0, %v178
        %v180 = vrot.slane %v160, %v179
        %v181 = vmul.f32 %v176, %v180
        %v182 = vlaneseq
        %v183 = vshrl.u32 %v182, 7
        %v184 = vsub.s32 0, %v183
        %v185 = vrot.slane %v161, %v184
        %v186 = vadd.f32 %v181, %v185
        %187 = vst.msk [vmem:[%s158] sm:$0xff] %vm162, %v186
        %s188 = sand.u32 %s74, 1
        %s189 = scalar_lea.sflag [#allocation4], %s188
        %s190 = sand.u32 %s74, 1
        %s191 = smul.addr %s190, 8
        %s192 = scalar_lea.vmem [#allocation5], %s191
        // Predicated region
        $region33: #{tpu_custom_call.1} parent=27 // pred_check
          %p193 = pneg %p84
        $region34: #{tpu_custom_call.1} parent=27 // pred_check_branch
          %195 = sbr.rel (%p193) target = $region36
        $region35: #{tpu_custom_call.1} parent=27 // pred_region
          %s197 = ssub.s32 128, 128
          %198 = vsyncadd %s189, %s197
          %s199 = smul.addr %s19, 128
          %s200 = scalar_lea.hbm %s2, %s199
          %s202 = sshll.u32 %s192, 4
          %s203 = int_to_ptr.vmem [resolvable:$true] %s202
          %205 = dma.vmem_to_hbm [thread:$0]  %s203, 128, %s200, %s189
        $region36: #{tpu_custom_call.1} parent=27 // pred_fallthru
          _
      $region28: #{tpu_custom_call.1} parent=5 // pred_fallthru
        _
      %p206 = scmp.le.s32.totalorder 2, %s14
      // Predicated region
      $region37: #{tpu_custom_call.1} parent=5 // pred_check
        %p207 = pneg %p206
      $region38: #{tpu_custom_call.1} parent=5 // pred_check_branch
        %209 = sbr.rel (%p207) target = $region40
      $region39: #{tpu_custom_call.1} parent=5 // pred_region
        %s210 = ssub.s32 %s14, 2
        // Predicated region
        $region41: #{tpu_custom_call.1} parent=39 // pred_check
          %p211 = pneg %p90
        $region42: #{tpu_custom_call.1} parent=39 // pred_check_branch
          %213 = sbr.rel (%p211) target = $region44
        $region43: #{tpu_custom_call.1} parent=39 // pred_region
          %s214 = sand.u32 %s75, 1
          %s215 = scalar_lea.sflag [#allocation4], %s214
          %s216 = sand.u32 %s75, 1
          %s217 = smul.addr %s216, 8
          %s218 = scalar_lea.vmem [#allocation5], %s217
          %219 = dma.done %s215, 128
        $region44: #{tpu_custom_call.1} parent=39 // pred_fallthru
          _
      $region40: #{tpu_custom_call.1} parent=5 // pred_fallthru
        _
    $region6: #{tpu_custom_call.1} parent=1 // loop_footer
      %s18 = sadd.s32 1, %s14
    $region7: #{tpu_custom_call.1} parent=1 // loop_footer_branch
      %13 = sbr.rel target = $region3
    $region8: #{tpu_custom_call.1} parent=1 // loop_exit
      _
    %220 = vsyncpa [#allocation3], 1
    %s221 = scalar_lea.sflag [#allocation3], 1
    %222 = vsyncpa %s221, 1
    %223 = vsyncpa [#allocation4], 1
    %s224 = scalar_lea.sflag [#allocation4], 1
    %225 = vsyncpa %s224, 1

</llo_original>
